<compile_context>
chip_gen: v5e
topology: v5e:2x2
jax: 0.10.0
libtpu: 0.0.40
codegen_flags: <defaults>
</compile_context>

<pallas_src>
import functools

import jax
import jax.numpy as jnp
from jax.experimental import pallas as pl
from jax.experimental.pallas import tpu as pltpu


def _cvae_hybrid_kernel(
    # inputs
    xy_ref, y_ref, eps_ref,
    # encoder params
    we1_ref, be1_ref, wmulv_ref, bmulv_ref,
    # decoder params
    wd1z_ref, wd1y_ref, bd1_ref, wd2_ref, bd2_ref,
    # forward-model params
    wf1_ref, bf1_ref, wf2_ref, bf2_ref,
    # single packed output: [x_pred | mu | logvar | x_hat | y_pred]
    out_ref,
    *, B, Z,
):
  xy = xy_ref[...]    # [B, Dx+Dy]  (already f32)
  y = y_ref[...]      # [B, Dy]
  eps = eps_ref[...]  # [B, Z]

  # ----- encoder: h = relu([x|y] @ We1 + be1) (single MXU push) -----
  h = jnp.maximum(
      jnp.dot(xy, we1_ref[...], preferred_element_type=jnp.float32) + be1_ref[...],
      0.0)

  # ----- fused mu/logvar projection: one [H, 2Z] matmul, then slice -----
  mulv = (jnp.dot(h, wmulv_ref[...], preferred_element_type=jnp.float32)
          + bmulv_ref[...])
  mu = mulv[:, :Z]
  logvar = mulv[:, Z:]

  # ----- reparameterization -----
  z = mu + eps * jnp.exp(0.5 * logvar)

  # ----- decoder on stacked latents [z; mu] (shared weights, one pass) -----
  # Hoist the y-conditioning + bias once; reuse for both halves.
  y_cond = (jnp.dot(y, wd1y_ref[...], preferred_element_type=jnp.float32)
            + bd1_ref[...])                              # [B, H]
  latents = jnp.concatenate([z, mu], axis=0)             # [2B, Z]
  y_cond2 = jnp.concatenate([y_cond, y_cond], axis=0)    # [2B, H]
  hd = jnp.maximum(
      jnp.dot(latents, wd1z_ref[...], preferred_element_type=jnp.float32)
      + y_cond2,
      0.0)
  dec = (jnp.dot(hd, wd2_ref[...], preferred_element_type=jnp.float32)
         + bd2_ref[...])                                 # [2B, Dx]
  x_hat = dec[:B]
  x_pred = dec[B:]

  # ----- forward model: y_pred = MLP(x_pred) -----
  hf = jnp.maximum(
      jnp.dot(x_pred, wf1_ref[...], preferred_element_type=jnp.float32)
      + bf1_ref[...],
      0.0)
  y_pred = (jnp.dot(hf, wf2_ref[...], preferred_element_type=jnp.float32)
            + bf2_ref[...])

  # ----- single lane-packed store -----
  out_ref[...] = jnp.concatenate(
      [x_pred, mu, logvar, x_hat, y_pred], axis=1).astype(out_ref.dtype)


def pack_params(p):
  """One-time (outside jit) fusion of weights for the fused-matmul kernel."""
  return {
      "we1": jnp.concatenate([p["we1x"], p["we1y"]], axis=0),    # [Dx+Dy, H]
      "be1": p["be1"],
      "wmulv": jnp.concatenate([p["wmu"], p["wlv"]], axis=1),    # [H, 2Z]
      "bmulv": jnp.concatenate([p["bmu"], p["blv"]], axis=1),    # [1, 2Z]
      "wd1z": p["wd1z"], "wd1y": p["wd1y"], "bd1": p["bd1"],
      "wd2": p["wd2"], "bd2": p["bd2"],
      "wf1": p["wf1"], "bf1": p["bf1"],
      "wf2": p["wf2"], "bf2": p["bf2"],
  }


@jax.jit
def cvae_hybrid_forward(x, y, eps, packed):
  B, Dx = x.shape
  _, Dy = y.shape
  _, Z = eps.shape
  H = packed["we1"].shape[1]
  Dyp = packed["wf2"].shape[1]
  Dtot = Dx + Z + Z + Dx + Dyp

  xy = jnp.concatenate([x, y], axis=1)   # encoder input pre-concat (cheap)

  args = (
      xy, y, eps,
      packed["we1"], packed["be1"], packed["wmulv"], packed["bmulv"],
      packed["wd1z"], packed["wd1y"], packed["bd1"], packed["wd2"], packed["bd2"],
      packed["wf1"], packed["bf1"], packed["wf2"], packed["bf2"],
  )

  # Advisory cost estimate so XLA can schedule around the custom call.
  flops = 2 * (
      B * (Dx + Dy) * H          # encoder
      + B * H * (2 * Z)          # mu|logvar
      + B * Dy * H               # y-conditioning
      + 2 * B * Z * H            # stacked decoder layer 1
      + 2 * B * H * Dx           # stacked decoder layer 2
      + B * Dx * H               # forward model layer 1
      + B * H * Dyp              # forward model layer 2
  )
  bytes_accessed = 4 * (sum(int(a.size) for a in args) + B * Dtot)
  cost = pl.CostEstimate(flops=flops, transcendentals=B * Z,
                         bytes_accessed=bytes_accessed)

  vmem = pl.BlockSpec(memory_space=pltpu.MemorySpace.VMEM)
  slab = pl.pallas_call(
      functools.partial(_cvae_hybrid_kernel, B=B, Z=Z),
      out_shape=jax.ShapeDtypeStruct((B, Dtot), jnp.float32),
      in_specs=[vmem] * len(args),
      out_specs=vmem,
      cost_estimate=cost,
  )(*args)

  x_pred = slab[:, :Dx]
  mu = slab[:, Dx:Dx + Z]
  logvar = slab[:, Dx + Z:Dx + 2 * Z]
  x_hat = slab[:, Dx + 2 * Z:2 * Dx + 2 * Z]
  y_pred = slab[:, 2 * Dx + 2 * Z:]
  return x_pred, mu, logvar, x_hat, y_pred


def _init_params(key, Dx, Dy, H, Z, Dyp):
  ks = jax.random.split(key, 16)
  s = 0.1

  def w(k, shape):
    return (s * jax.random.normal(k, shape)).astype(jnp.float32)

  return {
      # encoder Linear(Dx+Dy -> H) split into x-/y- parts (fused in pack_params)
      "we1x": w(ks[0], (Dx, H)),
      "we1y": w(ks[1], (Dy, H)),
      "be1": w(ks[2], (1, H)),
      "wmu": w(ks[3], (H, Z)),
      "bmu": w(ks[4], (1, Z)),
      "wlv": w(ks[5], (H, Z)),
      "blv": w(ks[6], (1, Z)),
      # decoder Linear(Z+Dy -> H) split, then Linear(H -> Dx)
      "wd1z": w(ks[7], (Z, H)),
      "wd1y": w(ks[8], (Dy, H)),
      "bd1": w(ks[9], (1, H)),
      "wd2": w(ks[10], (H, Dx)),
      "bd2": w(ks[11], (1, Dx)),
      # forward model Linear(Dx -> H) -> relu -> Linear(H -> Dyp)
      "wf1": w(ks[12], (Dx, H)),
      "bf1": w(ks[13], (1, H)),
      "wf2": w(ks[14], (H, Dyp)),
      "bf2": w(ks[15], (1, Dyp)),
  }


def _reference(x, y, eps, p):
  """Pure-JAX reference (unfused) for correctness checking."""
  h = jnp.maximum(x @ p["we1x"] + y @ p["we1y"] + p["be1"], 0.0)
  mu = h @ p["wmu"] + p["bmu"]
  logvar = h @ p["wlv"] + p["blv"]
  z = mu + eps * jnp.exp(0.5 * logvar)

  def decode(l):
    hd = jnp.maximum(l @ p["wd1z"] + y @ p["wd1y"] + p["bd1"], 0.0)
    return hd @ p["wd2"] + p["bd2"]

  x_hat = decode(z)
  x_pred = decode(mu)
  hf = jnp.maximum(x_pred @ p["wf1"] + p["bf1"], 0.0)
  y_pred = hf @ p["wf2"] + p["bf2"]
  return x_pred, mu, logvar, x_hat, y_pred


if __name__ == "__main__":
  B, Dx, Dy, H, Z = 8, 16, 8, 32, 8
  Dyp = Dy  # forward model maps x_pred -> y space

  key = jax.random.PRNGKey(0)
  kx, ky, keps, kp = jax.random.split(key, 4)
  x = jax.random.normal(kx, (B, Dx), dtype=jnp.float32)
  y = jax.random.normal(ky, (B, Dy), dtype=jnp.float32)
  eps = jax.random.normal(keps, (B, Z), dtype=jnp.float32)
  params = _init_params(kp, Dx, Dy, H, Z, Dyp)
  packed = pack_params(params)   # one-time weight fusion

  outs = cvae_hybrid_forward(x, y, eps, packed)
  outs = jax.block_until_ready(outs)

  refs = _reference(x, y, eps, params)
  for o, r in zip(outs, refs):
    assert o.shape == r.shape
    assert jnp.max(jnp.abs(o - r)) < 1e-4

  print("KERNEL_OK")
</pallas_src>

<mosaic_0001>
module attributes {stable_mosaic.version = 11 : i64} {
  func.func @_cvae_hybrid_kernel(%arg0: memref<8x24xf32, #tpu.memory_space<vmem>>, %arg1: memref<8x8xf32, #tpu.memory_space<vmem>>, %arg2: memref<8x8xf32, #tpu.memory_space<vmem>>, %arg3: memref<24x32xf32, #tpu.memory_space<vmem>>, %arg4: memref<1x32xf32, #tpu.memory_space<vmem>>, %arg5: memref<32x16xf32, #tpu.memory_space<vmem>>, %arg6: memref<1x16xf32, #tpu.memory_space<vmem>>, %arg7: memref<8x32xf32, #tpu.memory_space<vmem>>, %arg8: memref<8x32xf32, #tpu.memory_space<vmem>>, %arg9: memref<1x32xf32, #tpu.memory_space<vmem>>, %arg10: memref<32x16xf32, #tpu.memory_space<vmem>>, %arg11: memref<1x16xf32, #tpu.memory_space<vmem>>, %arg12: memref<16x32xf32, #tpu.memory_space<vmem>>, %arg13: memref<1x32xf32, #tpu.memory_space<vmem>>, %arg14: memref<32x8xf32, #tpu.memory_space<vmem>>, %arg15: memref<1x8xf32, #tpu.memory_space<vmem>>, %arg16: memref<8x56xf32, #tpu.memory_space<vmem>>) attributes {dimension_semantics = [], scalar_prefetch = 0 : i64, scratch_operands = 0 : i64, tpu.core_type = #tpu.core_type<tc>} {
    %c0 = arith.constant 0 : index
    %c0_0 = arith.constant 0 : index
    %0 = vector.load %arg0[%c0, %c0_0] : memref<8x24xf32, #tpu.memory_space<vmem>>, vector<8x24xf32>
    %c0_1 = arith.constant 0 : index
    %c0_2 = arith.constant 0 : index
    %1 = vector.load %arg1[%c0_1, %c0_2] : memref<8x8xf32, #tpu.memory_space<vmem>>, vector<8x8xf32>
    %c0_3 = arith.constant 0 : index
    %c0_4 = arith.constant 0 : index
    %2 = vector.load %arg2[%c0_3, %c0_4] : memref<8x8xf32, #tpu.memory_space<vmem>>, vector<8x8xf32>
    %c0_5 = arith.constant 0 : index
    %c0_6 = arith.constant 0 : index
    %3 = vector.load %arg3[%c0_5, %c0_6] : memref<24x32xf32, #tpu.memory_space<vmem>>, vector<24x32xf32>
    %cst = arith.constant dense<0.000000e+00> : vector<8x32xf32>
    %4 = tpu.matmul %0, %3, %cst {dimension_numbers = #tpu.dot_dimension_numbers<[1], [0], [0], [1], [0, 0, 1, 1], [], []>} : vector<8x24xf32>, vector<24x32xf32>, vector<8x32xf32> -> vector<8x32xf32>
    %c0_7 = arith.constant 0 : index
    %c0_8 = arith.constant 0 : index
    %5 = vector.load %arg4[%c0_7, %c0_8] : memref<1x32xf32, #tpu.memory_space<vmem>>, vector<1x32xf32>
    %6 = vector.broadcast %5 : vector<1x32xf32> to vector<8x32xf32>
    %7 = arith.addf %4, %6 : vector<8x32xf32>
    %cst_9 = arith.constant 0.000000e+00 : f32
    %8 = vector.broadcast %cst_9 : f32 to vector<8x32xf32>
    %9 = arith.maximumf %7, %8 : vector<8x32xf32>
    %c0_10 = arith.constant 0 : index
    %c0_11 = arith.constant 0 : index
    %10 = vector.load %arg5[%c0_10, %c0_11] : memref<32x16xf32, #tpu.memory_space<vmem>>, vector<32x16xf32>
    %cst_12 = arith.constant dense<0.000000e+00> : vector<8x16xf32>
    %11 = tpu.matmul %9, %10, %cst_12 {dimension_numbers = #tpu.dot_dimension_numbers<[1], [0], [0], [1], [0, 0, 1, 1], [], []>} : vector<8x32xf32>, vector<32x16xf32>, vector<8x16xf32> -> vector<8x16xf32>
    %c0_13 = arith.constant 0 : index
    %c0_14 = arith.constant 0 : index
    %12 = vector.load %arg6[%c0_13, %c0_14] : memref<1x16xf32, #tpu.memory_space<vmem>>, vector<1x16xf32>
    %13 = vector.broadcast %12 : vector<1x16xf32> to vector<8x16xf32>
    %14 = arith.addf %11, %13 : vector<8x16xf32>
    %15 = vector.extract_strided_slice %14 {offsets = [0, 0], sizes = [8, 8], strides = [1, 1]} : vector<8x16xf32> to vector<8x8xf32>
    %16 = vector.extract_strided_slice %14 {offsets = [0, 8], sizes = [8, 8], strides = [1, 1]} : vector<8x16xf32> to vector<8x8xf32>
    %cst_15 = arith.constant 5.000000e-01 : f32
    %17 = vector.broadcast %cst_15 : f32 to vector<8x8xf32>
    %18 = arith.mulf %17, %16 : vector<8x8xf32>
    %19 = math.exp %18 : vector<8x8xf32>
    %20 = arith.mulf %2, %19 : vector<8x8xf32>
    %21 = arith.addf %15, %20 : vector<8x8xf32>
    %c0_16 = arith.constant 0 : index
    %c0_17 = arith.constant 0 : index
    %22 = vector.load %arg8[%c0_16, %c0_17] : memref<8x32xf32, #tpu.memory_space<vmem>>, vector<8x32xf32>
    %cst_18 = arith.constant dense<0.000000e+00> : vector<8x32xf32>
    %23 = tpu.matmul %1, %22, %cst_18 {dimension_numbers = #tpu.dot_dimension_numbers<[1], [0], [0], [1], [0, 0, 1, 1], [], []>} : vector<8x8xf32>, vector<8x32xf32>, vector<8x32xf32> -> vector<8x32xf32>
    %c0_19 = arith.constant 0 : index
    %c0_20 = arith.constant 0 : index
    %24 = vector.load %arg9[%c0_19, %c0_20] : memref<1x32xf32, #tpu.memory_space<vmem>>, vector<1x32xf32>
    %25 = vector.broadcast %24 : vector<1x32xf32> to vector<8x32xf32>
    %26 = arith.addf %23, %25 : vector<8x32xf32>
    %27 = tpu.concatenate %21, %15 in 0 : vector<8x8xf32>, vector<8x8xf32> -> vector<16x8xf32>
    %28 = tpu.concatenate %26, %26 in 0 : vector<8x32xf32>, vector<8x32xf32> -> vector<16x32xf32>
    %c0_21 = arith.constant 0 : index
    %c0_22 = arith.constant 0 : index
    %29 = vector.load %arg7[%c0_21, %c0_22] : memref<8x32xf32, #tpu.memory_space<vmem>>, vector<8x32xf32>
    %cst_23 = arith.constant dense<0.000000e+00> : vector<16x32xf32>
    %30 = tpu.matmul %27, %29, %cst_23 {dimension_numbers = #tpu.dot_dimension_numbers<[1], [0], [0], [1], [0, 0, 1, 1], [], []>} : vector<16x8xf32>, vector<8x32xf32>, vector<16x32xf32> -> vector<16x32xf32>
    %31 = arith.addf %30, %28 : vector<16x32xf32>
    %cst_24 = arith.constant 0.000000e+00 : f32
    %32 = vector.broadcast %cst_24 : f32 to vector<16x32xf32>
    %33 = arith.maximumf %31, %32 : vector<16x32xf32>
    %c0_25 = arith.constant 0 : index
    %c0_26 = arith.constant 0 : index
    %34 = vector.load %arg10[%c0_25, %c0_26] : memref<32x16xf32, #tpu.memory_space<vmem>>, vector<32x16xf32>
    %cst_27 = arith.constant dense<0.000000e+00> : vector<16x16xf32>
    %35 = tpu.matmul %33, %34, %cst_27 {dimension_numbers = #tpu.dot_dimension_numbers<[1], [0], [0], [1], [0, 0, 1, 1], [], []>} : vector<16x32xf32>, vector<32x16xf32>, vector<16x16xf32> -> vector<16x16xf32>
    %c0_28 = arith.constant 0 : index
    %c0_29 = arith.constant 0 : index
    %36 = vector.load %arg11[%c0_28, %c0_29] : memref<1x16xf32, #tpu.memory_space<vmem>>, vector<1x16xf32>
    %37 = vector.broadcast %36 : vector<1x16xf32> to vector<16x16xf32>
    %38 = arith.addf %35, %37 : vector<16x16xf32>
    %39 = vector.extract_strided_slice %38 {offsets = [0, 0], sizes = [8, 16], strides = [1, 1]} : vector<16x16xf32> to vector<8x16xf32>
    %40 = vector.extract_strided_slice %38 {offsets = [8, 0], sizes = [8, 16], strides = [1, 1]} : vector<16x16xf32> to vector<8x16xf32>
    %c0_30 = arith.constant 0 : index
    %c0_31 = arith.constant 0 : index
    %41 = vector.load %arg12[%c0_30, %c0_31] : memref<16x32xf32, #tpu.memory_space<vmem>>, vector<16x32xf32>
    %cst_32 = arith.constant dense<0.000000e+00> : vector<8x32xf32>
    %42 = tpu.matmul %40, %41, %cst_32 {dimension_numbers = #tpu.dot_dimension_numbers<[1], [0], [0], [1], [0, 0, 1, 1], [], []>} : vector<8x16xf32>, vector<16x32xf32>, vector<8x32xf32> -> vector<8x32xf32>
    %c0_33 = arith.constant 0 : index
    %c0_34 = arith.constant 0 : index
    %43 = vector.load %arg13[%c0_33, %c0_34] : memref<1x32xf32, #tpu.memory_space<vmem>>, vector<1x32xf32>
    %44 = vector.broadcast %43 : vector<1x32xf32> to vector<8x32xf32>
    %45 = arith.addf %42, %44 : vector<8x32xf32>
    %cst_35 = arith.constant 0.000000e+00 : f32
    %46 = vector.broadcast %cst_35 : f32 to vector<8x32xf32>
    %47 = arith.maximumf %45, %46 : vector<8x32xf32>
    %c0_36 = arith.constant 0 : index
    %c0_37 = arith.constant 0 : index
    %48 = vector.load %arg14[%c0_36, %c0_37] : memref<32x8xf32, #tpu.memory_space<vmem>>, vector<32x8xf32>
    %cst_38 = arith.constant dense<0.000000e+00> : vector<8x8xf32>
    %49 = tpu.matmul %47, %48, %cst_38 {dimension_numbers = #tpu.dot_dimension_numbers<[1], [0], [0], [1], [0, 0, 1, 1], [], []>} : vector<8x32xf32>, vector<32x8xf32>, vector<8x8xf32> -> vector<8x8xf32>
    %c0_39 = arith.constant 0 : index
    %c0_40 = arith.constant 0 : index
    %50 = vector.load %arg15[%c0_39, %c0_40] : memref<1x8xf32, #tpu.memory_space<vmem>>, vector<1x8xf32>
    %51 = vector.broadcast %50 : vector<1x8xf32> to vector<8x8xf32>
    %52 = arith.addf %49, %51 : vector<8x8xf32>
    %53 = tpu.concatenate %40, %15, %16, %39, %52 in 1 : vector<8x16xf32>, vector<8x8xf32>, vector<8x8xf32>, vector<8x16xf32>, vector<8x8xf32> -> vector<8x56xf32>
    %c0_41 = arith.constant 0 : index
    %c0_42 = arith.constant 0 : index
    %54 = vector.load %arg16[%c0_41, %c0_42] : memref<8x56xf32, #tpu.memory_space<vmem>>, vector<8x56xf32>
    tpu.vector_store %arg16[%c0_41, %c0_42], %53 {strides = array<i32>} : memref<8x56xf32, #tpu.memory_space<vmem>>, vector<8x56xf32>,
    return
  }
}

</mosaic_0001>

<llo_original>
// kernel: cvae_hybrid_forward.1
$region0: #{cvae_hybrid_forward.1}
  #allocation0 [shape = 'u32[]', space=smem, size = 0x4, offset = 0x4, fixed_abs, tag = 'smem constant byte address 0x4 - core index']
  #allocation1 [shape = 'u32[72,128]{1,0:T(1,128)}', space=vmem, size = 0x9000, scoped, tag = 'internal scratch']
  %s0 = inlined_call_operand.vmem [shape: f32[8,24], index: 0, kind: input, shape index: {}]
  %s1 = inlined_call_operand.vmem [shape: f32[8,8], index: 1, kind: input, shape index: {}]
  %s2 = inlined_call_operand.vmem [shape: f32[8,8], index: 2, kind: input, shape index: {}]
  %s3 = inlined_call_operand.vmem [shape: f32[24,32], index: 3, kind: input, shape index: {}]
  %s4 = inlined_call_operand.vmem [shape: f32[1,32], index: 4, kind: input, shape index: {}]
  %s5 = inlined_call_operand.vmem [shape: f32[32,16], index: 5, kind: input, shape index: {}]
  %s6 = inlined_call_operand.vmem [shape: f32[1,16], index: 6, kind: input, shape index: {}]
  %s7 = inlined_call_operand.vmem [shape: f32[8,32], index: 7, kind: input, shape index: {}]
  %s8 = inlined_call_operand.vmem [shape: f32[8,32], index: 8, kind: input, shape index: {}]
  %s9 = inlined_call_operand.vmem [shape: f32[1,32], index: 9, kind: input, shape index: {}]
  %s10 = inlined_call_operand.vmem [shape: f32[32,16], index: 10, kind: input, shape index: {}]
  %s11 = inlined_call_operand.vmem [shape: f32[1,16], index: 11, kind: input, shape index: {}]
  %s12 = inlined_call_operand.vmem [shape: f32[16,32], index: 12, kind: input, shape index: {}]
  %s13 = inlined_call_operand.vmem [shape: f32[1,32], index: 13, kind: input, shape index: {}]
  %s14 = inlined_call_operand.vmem [shape: f32[32,8], index: 14, kind: input, shape index: {}]
  %s15 = inlined_call_operand.vmem [shape: f32[1,8], index: 15, kind: input, shape index: {}]
  %s16 = inlined_call_operand.vmem [shape: f32[8,56], index: 16, kind: output, shape index: {}]
  %s17 = sld [smem:[#allocation0]]
  $region74: #{cvae_hybrid_forward.1} parent=0
    _
  %s19 = ssub.s32 1, %s17
  %s20 = scalar_select 0, %s19, %s17
  // Predicated region
  $region2: #{cvae_hybrid_forward.1} parent=0 // pred_check
    _
  $region3: #{cvae_hybrid_forward.1} parent=0 // pred_check_branch
    %22 = sbr.rel (0) target = $region5
  $region4: #{cvae_hybrid_forward.1} parent=0 // pred_region
    _
  $region5: #{cvae_hybrid_forward.1} parent=0 // pred_fallthru
    _
  // Predicated region
  $region6: #{cvae_hybrid_forward.1} parent=0 // pred_check
    _
  $region7: #{cvae_hybrid_forward.1} parent=0 // pred_check_branch
    %24 = sbr.rel (0) target = $region9
  $region8: #{cvae_hybrid_forward.1} parent=0 // pred_region
    _
  $region9: #{cvae_hybrid_forward.1} parent=0 // pred_fallthru
    _
  // Predicated region
  $region10: #{cvae_hybrid_forward.1} parent=0 // pred_check
    _
  $region11: #{cvae_hybrid_forward.1} parent=0 // pred_check_branch
    %26 = sbr.rel (0) target = $region13
  $region12: #{cvae_hybrid_forward.1} parent=0 // pred_region
    _
  $region13: #{cvae_hybrid_forward.1} parent=0 // pred_fallthru
    _
  // Predicated region
  $region14: #{cvae_hybrid_forward.1} parent=0 // pred_check
    _
  $region15: #{cvae_hybrid_forward.1} parent=0 // pred_check_branch
    %28 = sbr.rel (0) target = $region17
  $region16: #{cvae_hybrid_forward.1} parent=0 // pred_region
    _
  $region17: #{cvae_hybrid_forward.1} parent=0 // pred_fallthru
    _
  // Predicated region
  $region18: #{cvae_hybrid_forward.1} parent=0 // pred_check
    _
  $region19: #{cvae_hybrid_forward.1} parent=0 // pred_check_branch
    %30 = sbr.rel (0) target = $region21
  $region20: #{cvae_hybrid_forward.1} parent=0 // pred_region
    _
  $region21: #{cvae_hybrid_forward.1} parent=0 // pred_fallthru
    _
  // Predicated region
  $region22: #{cvae_hybrid_forward.1} parent=0 // pred_check
    _
  $region23: #{cvae_hybrid_forward.1} parent=0 // pred_check_branch
    %32 = sbr.rel (0) target = $region25
  $region24: #{cvae_hybrid_forward.1} parent=0 // pred_region
    _
  $region25: #{cvae_hybrid_forward.1} parent=0 // pred_fallthru
    _
  // Predicated region
  $region26: #{cvae_hybrid_forward.1} parent=0 // pred_check
    _
  $region27: #{cvae_hybrid_forward.1} parent=0 // pred_check_branch
    %34 = sbr.rel (0) target = $region29
  $region28: #{cvae_hybrid_forward.1} parent=0 // pred_region
    _
  $region29: #{cvae_hybrid_forward.1} parent=0 // pred_fallthru
    _
  // Predicated region
  $region30: #{cvae_hybrid_forward.1} parent=0 // pred_check
    _
  $region31: #{cvae_hybrid_forward.1} parent=0 // pred_check_branch
    %36 = sbr.rel (0) target = $region33
  $region32: #{cvae_hybrid_forward.1} parent=0 // pred_region
    _
  $region33: #{cvae_hybrid_forward.1} parent=0 // pred_fallthru
    _
  // Predicated region
  $region34: #{cvae_hybrid_forward.1} parent=0 // pred_check
    _
  $region35: #{cvae_hybrid_forward.1} parent=0 // pred_check_branch
    %38 = sbr.rel (0) target = $region37
  $region36: #{cvae_hybrid_forward.1} parent=0 // pred_region
    _
  $region37: #{cvae_hybrid_forward.1} parent=0 // pred_fallthru
    _
  // Predicated region
  $region38: #{cvae_hybrid_forward.1} parent=0 // pred_check
    _
  $region39: #{cvae_hybrid_forward.1} parent=0 // pred_check_branch
    %40 = sbr.rel (0) target = $region41
  $region40: #{cvae_hybrid_forward.1} parent=0 // pred_region
    _
  $region41: #{cvae_hybrid_forward.1} parent=0 // pred_fallthru
    _
  // Predicated region
  $region42: #{cvae_hybrid_forward.1} parent=0 // pred_check
    _
  $region43: #{cvae_hybrid_forward.1} parent=0 // pred_check_branch
    %42 = sbr.rel (0) target = $region45
  $region44: #{cvae_hybrid_forward.1} parent=0 // pred_region
    _
  $region45: #{cvae_hybrid_forward.1} parent=0 // pred_fallthru
    _
  // Predicated region
  $region46: #{cvae_hybrid_forward.1} parent=0 // pred_check
    _
  $region47: #{cvae_hybrid_forward.1} parent=0 // pred_check_branch
    %44 = sbr.rel (0) target = $region49
  $region48: #{cvae_hybrid_forward.1} parent=0 // pred_region
    _
  $region49: #{cvae_hybrid_forward.1} parent=0 // pred_fallthru
    _
  // Predicated region
  $region50: #{cvae_hybrid_forward.1} parent=0 // pred_check
    _
  $region51: #{cvae_hybrid_forward.1} parent=0 // pred_check_branch
    %46 = sbr.rel (0) target = $region53
  $region52: #{cvae_hybrid_forward.1} parent=0 // pred_region
    _
  $region53: #{cvae_hybrid_forward.1} parent=0 // pred_fallthru
    _
  // Predicated region
  $region54: #{cvae_hybrid_forward.1} parent=0 // pred_check
    _
  $region55: #{cvae_hybrid_forward.1} parent=0 // pred_check_branch
    %48 = sbr.rel (0) target = $region57
  $region56: #{cvae_hybrid_forward.1} parent=0 // pred_region
    _
  $region57: #{cvae_hybrid_forward.1} parent=0 // pred_fallthru
    _
  // Predicated region
  $region58: #{cvae_hybrid_forward.1} parent=0 // pred_check
    _
  $region59: #{cvae_hybrid_forward.1} parent=0 // pred_check_branch
    %50 = sbr.rel (0) target = $region61
  $region60: #{cvae_hybrid_forward.1} parent=0 // pred_region
    _
  $region61: #{cvae_hybrid_forward.1} parent=0 // pred_fallthru
    _
  // Predicated region
  $region62: #{cvae_hybrid_forward.1} parent=0 // pred_check
    _
  $region63: #{cvae_hybrid_forward.1} parent=0 // pred_check_branch
    %52 = sbr.rel (0) target = $region65
  $region64: #{cvae_hybrid_forward.1} parent=0 // pred_region
    _
  $region65: #{cvae_hybrid_forward.1} parent=0 // pred_fallthru
    _
  %v53 = vld [vmem:[%s0] sm:$0xff]
  %v54 = vld [vmem:[%s1] sm:$0xff]
  %v55 = vld [vmem:[%s2] sm:$0xff]
  %v56 = vld [vmem:[%s3] sm:$0xff]
  %v57 = vld [vmem:[%s3 + $0x8] sm:$0xff]
  %v58 = vld [vmem:[%s3 + $0x10] sm:$0xff]
  %v59 = vld [vmem:[%s4] sm:$0x1]
  %v61 = vperm.slane %v59, 0
  %vm63 = vcmask 195584
  %v65 = vsel %vm63, %v53, 0
  %67 = vmatpush.msra.mxu0 0.0
  %68 = vmatpush.msra.mxu0 0.0
  %69 = vmatpush.msra.mxu0 0.0
  %70 = vmatpush.msra.mxu0 0.0
  %71 = vmatpush.msra.mxu0 0.0
  %72 = vmatpush.msra.mxu0 0.0
  %73 = vmatpush.msra.mxu0 0.0
  %74 = vmatpush.msra.mxu0 0.0
  %75 = vmatpush.msra.mxu0 0.0
  %76 = vmatpush.msra.mxu0 0.0
  %77 = vmatpush.msra.mxu0 0.0
  %78 = vmatpush.msra.mxu0 0.0
  %79 = vmatpush.msra.mxu0 0.0
  %80 = vmatpush.msra.mxu0 %v58
  %81 = vmatpush.msra.mxu0 %v57
  %82 = vmatpush.msra.mxu0 %v56
  %83 = vmatmul.f32.gmra.mxu0 %v65
  %v84 = vpop.f32.mrf.mxu0
  %v85 = vadd.f32 %v61, %v84
  %86 = vdwg.mxu0
  %v87 = vmax.f32 %v85, 0.0
  %v88 = vld [vmem:[%s5] sm:$0xff]
  %v89 = vld [vmem:[%s5 + $0x8] sm:$0xff]
  %v90 = vld [vmem:[%s5 + $0x10] sm:$0xff]
  %v91 = vld [vmem:[%s5 + $0x18] sm:$0xff]
  %v92 = vld [vmem:[%s6] sm:$0x1]
  %v94 = vperm.slane %v92, 0
  %vm96 = vcmask 261120
  %v98 = vsel %vm96, %v87, 0
  %100 = vmatpush.msra.mxu0 0.0
  %101 = vmatpush.msra.mxu0 0.0
  %102 = vmatpush.msra.mxu0 0.0
  %103 = vmatpush.msra.mxu0 0.0
  %104 = vmatpush.msra.mxu0 0.0
  %105 = vmatpush.msra.mxu0 0.0
  %106 = vmatpush.msra.mxu0 0.0
  %107 = vmatpush.msra.mxu0 0.0
  %108 = vmatpush.msra.mxu0 0.0
  %109 = vmatpush.msra.mxu0 0.0
  %110 = vmatpush.msra.mxu0 0.0
  %111 = vmatpush.msra.mxu0 0.0
  %112 = vmatpush.msra.mxu0 %v91
  %113 = vmatpush.msra.mxu0 %v90
  %114 = vmatpush.msra.mxu0 %v89
  %115 = vmatpush.msra.mxu0 %v88
  %116 = vmatmul.f32.gmra.mxu0 %v98
  %v117 = vpop.f32.mrf.mxu0
  %v118 = vadd.f32 %v94, %v117
  %119 = vdwg.mxu0
  %v120 = vmul.f32 %v118, 0.5
  %v121 = vmul.f32 %v120, 1.442695
  %v122 = vpow.pop %v121
  %124 = vrot.lane.b32.xlu0 %v122, 120
  %v125 = vpop.permute.xlu0 %124
  %v127 = vmul.f32 %v55, %v125
  %v128 = vadd.f32 %v118, %v127
  %v129 = vld [vmem:[%s8] sm:$0xff]
  %v130 = vld [vmem:[%s9] sm:$0x1]
  %v132 = vperm.slane %v130, 0
  %vm134 = vcmask 64512
  %v136 = vsel %vm134, %v54, 0
  %138 = vmatpush.msra.mxu0 0.0
  %139 = vmatpush.msra.mxu0 0.0
  %140 = vmatpush.msra.mxu0 0.0
  %141 = vmatpush.msra.mxu0 0.0
  %142 = vmatpush.msra.mxu0 0.0
  %143 = vmatpush.msra.mxu0 0.0
  %144 = vmatpush.msra.mxu0 0.0
  %145 = vmatpush.msra.mxu0 0.0
  %146 = vmatpush.msra.mxu0 0.0
  %147 = vmatpush.msra.mxu0 0.0
  %148 = vmatpush.msra.mxu0 0.0
  %149 = vmatpush.msra.mxu0 0.0
  %150 = vmatpush.msra.mxu0 0.0
  %151 = vmatpush.msra.mxu0 0.0
  %152 = vmatpush.msra.mxu0 0.0
  %153 = vmatpush.msra.mxu0 %v129
  %154 = vmatmul.f32.gmra.mxu0 %v136
  %v155 = vpop.f32.mrf.mxu0
  %v156 = vadd.f32 %v132, %v155
  %157 = vdwg.mxu0
  %v158 = vld [vmem:[%s7] sm:$0xff]
  %v160 = vsel %vm134, %v128, 0
  %v163 = vsel %vm134, %v118, 0
  %165 = vmatpush.msra.mxu0 0.0
  %166 = vmatpush.msra.mxu0 0.0
  %167 = vmatpush.msra.mxu0 0.0
  %168 = vmatpush.msra.mxu0 0.0
  %169 = vmatpush.msra.mxu0 0.0
  %170 = vmatpush.msra.mxu0 0.0
  %171 = vmatpush.msra.mxu0 0.0
  %172 = vmatpush.msra.mxu0 0.0
  %173 = vmatpush.msra.mxu0 0.0
  %174 = vmatpush.msra.mxu0 0.0
  %175 = vmatpush.msra.mxu0 0.0
  %176 = vmatpush.msra.mxu0 0.0
  %177 = vmatpush.msra.mxu0 0.0
  %178 = vmatpush.msra.mxu0 0.0
  %179 = vmatpush.msra.mxu0 0.0
  %180 = vmatpush.msra.mxu0 %v158
  %181 = vmatmul.f32.gmra.mxu0 %v160
  %v182 = vpop.f32.mrf.mxu0
  %v183 = vadd.f32 %v156, %v182
  %184 = vmatmul.f32.gmra.mxu0 %v163
  %v185 = vpop.f32.mrf.mxu0
  %v186 = vadd.f32 %v156, %v185
  %187 = vdwg.mxu0
  %v188 = vmax.f32 %v183, 0.0
  %v189 = vmax.f32 %v186, 0.0
  %v190 = vld [vmem:[%s10] sm:$0xff]
  %v191 = vld [vmem:[%s10 + $0x8] sm:$0xff]
  %v192 = vld [vmem:[%s10 + $0x10] sm:$0xff]
  %v193 = vld [vmem:[%s10 + $0x18] sm:$0xff]
  %v194 = vld [vmem:[%s11] sm:$0x1]
  %v196 = vperm.slane %v194, 0
  %v199 = vsel %vm96, %v188, 0
  %v202 = vsel %vm96, %v189, 0
  %204 = vmatpush.msra.mxu0 0.0
  %205 = vmatpush.msra.mxu0 0.0
  %206 = vmatpush.msra.mxu0 0.0
  %207 = vmatpush.msra.mxu0 0.0
  %208 = vmatpush.msra.mxu0 0.0
  %209 = vmatpush.msra.mxu0 0.0
  %210 = vmatpush.msra.mxu0 0.0
  %211 = vmatpush.msra.mxu0 0.0
  %212 = vmatpush.msra.mxu0 0.0
  %213 = vmatpush.msra.mxu0 0.0
  %214 = vmatpush.msra.mxu0 0.0
  %215 = vmatpush.msra.mxu0 0.0
  %216 = vmatpush.msra.mxu0 %v193
  %217 = vmatpush.msra.mxu0 %v192
  %218 = vmatpush.msra.mxu0 %v191
  %219 = vmatpush.msra.mxu0 %v190
  %220 = vmatmul.f32.gmra.mxu0 %v199
  %v221 = vpop.f32.mrf.mxu0
  %v222 = vadd.f32 %v196, %v221
  %223 = vmatmul.f32.gmra.mxu0 %v202
  %v224 = vpop.f32.mrf.mxu0
  %v225 = vadd.f32 %v196, %v224
  %226 = vdwg.mxu0
  %v227 = vld [vmem:[%s12] sm:$0xff]
  %v228 = vld [vmem:[%s12 + $0x8] sm:$0xff]
  %v229 = vld [vmem:[%s13] sm:$0x1]
  %v231 = vperm.slane %v229, 0
  %vm233 = vcmask 130048
  %v235 = vsel %vm233, %v225, 0
  %237 = vmatpush.msra.mxu0 0.0
  %238 = vmatpush.msra.mxu0 0.0
  %239 = vmatpush.msra.mxu0 0.0
  %240 = vmatpush.msra.mxu0 0.0
  %241 = vmatpush.msra.mxu0 0.0
  %242 = vmatpush.msra.mxu0 0.0
  %243 = vmatpush.msra.mxu0 0.0
  %244 = vmatpush.msra.mxu0 0.0
  %245 = vmatpush.msra.mxu0 0.0
  %246 = vmatpush.msra.mxu0 0.0
  %247 = vmatpush.msra.mxu0 0.0
  %248 = vmatpush.msra.mxu0 0.0
  %249 = vmatpush.msra.mxu0 0.0
  %250 = vmatpush.msra.mxu0 0.0
  %251 = vmatpush.msra.mxu0 %v228
  %252 = vmatpush.msra.mxu0 %v227
  %253 = vmatmul.f32.gmra.mxu0 %v235
  %v254 = vpop.f32.mrf.mxu0
  %v255 = vadd.f32 %v231, %v254
  %256 = vdwg.mxu0
  %v257 = vmax.f32 %v255, 0.0
  %v258 = vld [vmem:[%s14] sm:$0xff]
  %v259 = vld [vmem:[%s14 + $0x8] sm:$0xff]
  %v260 = vld [vmem:[%s14 + $0x10] sm:$0xff]
  %v261 = vld [vmem:[%s14 + $0x18] sm:$0xff]
  %v262 = vld [vmem:[%s15] sm:$0x1]
  %v264 = vperm.slane %v262, 0
  %v267 = vsel %vm96, %v257, 0
  %269 = vmatpush.msra.mxu0 0.0
  %270 = vmatpush.msra.mxu0 0.0
  %271 = vmatpush.msra.mxu0 0.0
  %272 = vmatpush.msra.mxu0 0.0
  %273 = vmatpush.msra.mxu0 0.0
  %274 = vmatpush.msra.mxu0 0.0
  %275 = vmatpush.msra.mxu0 0.0
  %276 = vmatpush.msra.mxu0 0.0
  %277 = vmatpush.msra.mxu0 0.0
  %278 = vmatpush.msra.mxu0 0.0
  %279 = vmatpush.msra.mxu0 0.0
  %280 = vmatpush.msra.mxu0 0.0
  %281 = vmatpush.msra.mxu0 %v261
  %282 = vmatpush.msra.mxu0 %v260
  %283 = vmatpush.msra.mxu0 %v259
  %284 = vmatpush.msra.mxu0 %v258
  %285 = vmatmul.f32.gmra.mxu0 %v267
  %v286 = vpop.f32.mrf.mxu0
  %v287 = vadd.f32 %v264, %v286
  %288 = vdwg.mxu0
  %289 = vrot.lane.b32.xlu0 %v118, 16
  %v290 = vpop.permute.xlu0 %289
  %293 = vrot.lane.b32.xlu0 %v222, 32
  %v294 = vpop.permute.xlu0 %293
  %297 = vrot.lane.b32.xlu0 %v287, 48
  %v298 = vpop.permute.xlu0 %297
  %v300 = vsel %vm233, %v225, %v290
  %v301 = vsel %vm63, %v300, %v290
  %v302 = vsel %vm96, %v301, %v294
  %vm303 = vcmask 392192
  %v304 = vsel %vm303, %v302, %v298
  %vm305 = vcmask 457728
  %306 = vst.msk [vmem:[%s16] sm:$0xff] %vm305, %v304
  // Predicated region
  $region66: #{cvae_hybrid_forward.1} parent=0 // pred_check
    _
  $region67: #{cvae_hybrid_forward.1} parent=0 // pred_check_branch
    %308 = sbr.rel (0) target = $region69
  $region68: #{cvae_hybrid_forward.1} parent=0 // pred_region
    _
  $region69: #{cvae_hybrid_forward.1} parent=0 // pred_fallthru
    _
  // Predicated region
  $region70: #{cvae_hybrid_forward.1} parent=0 // pred_check
    _
  $region71: #{cvae_hybrid_forward.1} parent=0 // pred_check_branch
    %310 = sbr.rel (0) target = $region73
  $region72: #{cvae_hybrid_forward.1} parent=0 // pred_region
    _
  $region73: #{cvae_hybrid_forward.1} parent=0 // pred_fallthru
    _

</llo_original>
